<compile_context>
chip_gen: v5e
topology: v5e:2x2
jax: 0.10.0
libtpu: 0.0.40
codegen_flags: <defaults>
</compile_context>

<pallas_src>
import math

import jax
import jax.numpy as jnp
from jax.experimental import pallas as pl
from jax.experimental.pallas import tpu as pltpu

_TWO_PI = 2.0 * math.pi
_LANE = 128


def _round_up(n, m):
    return ((n + m - 1) // m) * m


def _choose_block(b, bytes_per_batch_elem, align, target_bytes=4 << 20):
    """Batch-axis tile: VMEM-budget derived (~4 MiB out tile, double-buffered
    stays well under the 16/32 MiB scoped-VMEM defaults), a multiple of
    `align`, never larger than the aligned batch, and capped so big batches
    give a grid of >= 2 steps (v7x 2-TC sharding + pipeline fill/drain)."""
    blk = max(align, (target_bytes // max(bytes_per_batch_elem, 1)) // align * align)
    b_al = _round_up(b, align)
    blk = min(blk, b_al)
    if b_al >= 2 * align:
        blk = min(blk, _round_up(b_al // 2, align))
    return blk


# --------------------- transposed (lane-dense) path --------------------------
# Used when 2*half_dim < 128 (typical time embedding, dim = 16..128).
def _sinusoidal_kernel_t(x_ref, w_ref, sc_ref):
    # x_ref : (1, TB)        f32   timestep tile, batch on the lane axis
    # w_ref : (half_dim, 1)  f32   learned frequencies (resident every step)
    # sc_ref: (2*half_dim, TB)     output tile, rows [sin | cos]
    half = w_ref.shape[0]
    w2pi = w_ref[...] * _TWO_PI                 # scale tiny weight column once
    freqs = w2pi * x_ref[...]                   # (half, TB) broadcast (VPU)
    sc_ref[:half, :] = jnp.sin(freqs).astype(sc_ref.dtype)   # lane-dense store
    sc_ref[half:, :] = jnp.cos(freqs).astype(sc_ref.dtype)   # sublane offset only


# --------------------- row-major path (wide embeddings) ----------------------
# Used when 2*half_dim >= 128: the output's last dim is already lane-dense.
def _sinusoidal_kernel_r(x_ref, w_ref, sc_ref):
    # x_ref : (TB, 1), w_ref : (1, half_dim), sc_ref : (TB, 2*half_dim)
    half = w_ref.shape[1]
    w2pi = w_ref[...] * _TWO_PI
    freqs = x_ref[...] * w2pi
    sc_ref[:, :half] = jnp.sin(freqs).astype(sc_ref.dtype)
    sc_ref[:, half:] = jnp.cos(freqs).astype(sc_ref.dtype)


def learned_sinusoidal_pos_emb(x, weights, *, out_dtype=jnp.float32,
                               block_b=None, return_parts=False):
    """x: (B,), weights: (half_dim,) -> (B, 2*half_dim + 1) = [x | sin | cos].

    return_parts=True returns (x_col, sincos) instead, so the consumer can
    absorb the passthrough timestep column and skip the odd-width concat
    (avoids an extra full-size HBM read+write at production sizes).
    """
    assert x.ndim == 1 and weights.ndim == 1
    b = x.shape[0]
    half_dim = weights.shape[0]
    out_cols = 2 * half_dim
    dsize = jnp.dtype(out_dtype).itemsize
    xf = x.astype(jnp.float32)
    wf = weights.astype(jnp.float32)

    if out_cols < _LANE:
        # ---------------- transposed, lane-dense path ----------------
        if block_b is None:
            block_b = _choose_block(b, out_cols * dsize, _LANE)
        block_b = _round_up(block_b, _LANE)
        b_pad = _round_up(b, block_b)

        x_t = xf.reshape(1, b)
        if b_pad != b:
            x_t = jnp.pad(x_t, ((0, 0), (0, b_pad - b)))
        w_col = wf.reshape(half_dim, 1)

        sincos_t = pl.pallas_call(
            _sinusoidal_kernel_t,
            out_shape=jax.ShapeDtypeStruct((out_cols, b_pad), out_dtype),
            grid=(b_pad // block_b,),
            in_specs=[
                pl.BlockSpec((1, block_b), lambda i: (0, i)),        # x row tile
                pl.BlockSpec((half_dim, 1), lambda i: (0, 0)),       # resident w
            ],
            out_specs=pl.BlockSpec((out_cols, block_b), lambda i: (0, i)),
            compiler_params=pltpu.CompilerParams(
                dimension_semantics=("parallel",),   # v7x: split batch over 2 TCs
            ),
        )(x_t, w_col)

        # Layout plumbing back to (B, 2*half_dim) stays in XLA where the
        # consumer can absorb it (its first matmul can also take (dim, B)).
        sincos = sincos_t[:, :b].T
    else:
        # ---------------- row-major path (already lane-dense) ----------------
        sub = 8 if dsize >= 4 else (16 if dsize == 2 else 32)  # sublane packing
        if block_b is None:
            block_b = _choose_block(b, out_cols * dsize, sub)
        block_b = _round_up(block_b, sub)
        b_pad = _round_up(b, block_b)

        x2d = xf.reshape(b, 1)
        if b_pad != b:
            x2d = jnp.pad(x2d, ((0, b_pad - b), (0, 0)))
        w_row = wf.reshape(1, half_dim)

        sincos = pl.pallas_call(
            _sinusoidal_kernel_r,
            out_shape=jax.ShapeDtypeStruct((b_pad, out_cols), out_dtype),
            grid=(b_pad // block_b,),
            in_specs=[
                pl.BlockSpec((block_b, 1), lambda i: (i, 0)),
                pl.BlockSpec((1, half_dim), lambda i: (0, 0)),
            ],
            out_specs=pl.BlockSpec((block_b, out_cols), lambda i: (i, 0)),
            compiler_params=pltpu.CompilerParams(
                dimension_semantics=("parallel",),
            ),
        )(x2d, w_row)
        if b_pad != b:
            sincos = sincos[:b]

    x_col = xf.reshape(b, 1).astype(out_dtype)
    if return_parts:
        return x_col, sincos
    # Kept for exact module semantics; prefer return_parts=True in production
    # (or fuse this embedding into the consumer) to avoid the extra HBM pass.
    return jnp.concatenate([x_col, sincos], axis=-1)


def _reference(x, weights):
    freqs = x[:, None] * weights[None, :] * _TWO_PI
    return jnp.concatenate([x[:, None], jnp.sin(freqs), jnp.cos(freqs)], axis=-1)


if __name__ == "__main__":
    key = jax.random.PRNGKey(0)
    k_w, k_x1, k_x2, k_w2, k_x3 = jax.random.split(key, 5)

    # Typical time-embedding config: dim=16 -> transposed lane-dense path.
    dim = 16
    half_dim = dim // 2
    weights = jax.random.normal(k_w, (half_dim,), dtype=jnp.float32)

    # Check 1: tiny batch (single grid step, heavy lane padding).
    x1 = jax.random.uniform(k_x1, (8,), dtype=jnp.float32)
    out1 = jax.block_until_ready(learned_sinusoidal_pos_emb(x1, weights))
    ref1 = _reference(x1, weights)
    assert out1.shape == (8, dim + 1)
    assert jnp.allclose(out1, ref1, atol=1e-4, rtol=1e-4)

    # Check 2: batch not a tile multiple + multi-step "parallel" grid.
    x2 = jax.random.uniform(k_x2, (300,), dtype=jnp.float32)
    out2 = jax.block_until_ready(learned_sinusoidal_pos_emb(x2, weights))
    ref2 = _reference(x2, weights)
    assert out2.shape == (300, dim + 1)
    assert jnp.allclose(out2, ref2, atol=1e-4, rtol=1e-4)

    # Check 3: bf16 output path (f32 math, cast only at the store).
    out3 = jax.block_until_ready(
        learned_sinusoidal_pos_emb(x1, weights, out_dtype=jnp.bfloat16))
    ref3 = _reference(x1, weights).astype(jnp.bfloat16).astype(jnp.float32)
    assert out3.dtype == jnp.bfloat16
    assert jnp.allclose(out3.astype(jnp.float32), ref3, atol=1e-2)

    # Check 4: wide embedding (2*half_dim >= 128) -> row-major fallback path.
    dim2 = 256
    weights2 = jax.random.normal(k_w2, (dim2 // 2,), dtype=jnp.float32)
    x3 = jax.random.uniform(k_x3, (20,), dtype=jnp.float32)
    out4 = jax.block_until_ready(learned_sinusoidal_pos_emb(x3, weights2))
    ref4 = _reference(x3, weights2)
    assert out4.shape == (20, dim2 + 1)
    assert jnp.allclose(out4, ref4, atol=1e-4, rtol=1e-4)

    print("KERNEL_OK")
</pallas_src>

<mosaic_0001>
module attributes {stable_mosaic.version = 11 : i64} {
  func.func @_sinusoidal_kernel_t(%arg0: i32, %arg1: memref<1x128xf32, #tpu.memory_space<vmem>>, %arg2: memref<8x1xf32, #tpu.memory_space<vmem>>, %arg3: memref<16x128xf32, #tpu.memory_space<vmem>>) attributes {dimension_semantics = [#tpu.dimension_semantics<parallel>], iteration_bounds = array<i64: 1>, scalar_prefetch = 0 : i64, scratch_operands = 0 : i64, tpu.core_type = #tpu.core_type<tc>, window_params = [{transform_indices = @transform_0, window_bounds = array<i64: 1, 128>}, {pipeline_mode = #tpu.pipeline_mode<synchronous>, transform_indices = @transform_1, window_bounds = array<i64: 8, 1>}, {transform_indices = @transform_2, window_bounds = array<i64: 16, 128>}]} {
    %c0 = arith.constant 0 : index
    %c0_0 = arith.constant 0 : index
    %0 = vector.load %arg2[%c0, %c0_0] : memref<8x1xf32, #tpu.memory_space<vmem>>, vector<8x1xf32>
    %cst = arith.constant 6.28318548 : f32
    %1 = vector.broadcast %cst : f32 to vector<8x1xf32>
    %2 = arith.mulf %0, %1 : vector<8x1xf32>
    %c0_1 = arith.constant 0 : index
    %c0_2 = arith.constant 0 : index
    %3 = vector.load %arg1[%c0_1, %c0_2] : memref<1x128xf32, #tpu.memory_space<vmem>>, vector<1x128xf32>
    %4 = vector.broadcast %2 : vector<8x1xf32> to vector<8x128xf32>
    %5 = vector.broadcast %3 : vector<1x128xf32> to vector<8x128xf32>
    %6 = arith.mulf %4, %5 : vector<8x128xf32>
    %7 = math.sin %6 : vector<8x128xf32>
    %c0_3 = arith.constant 0 : index
    %c0_4 = arith.constant 0 : index
    %8 = vector.load %arg3[%c0_3, %c0_4] : memref<16x128xf32, #tpu.memory_space<vmem>>, vector<8x128xf32>
    tpu.vector_store %arg3[%c0_3, %c0_4], %7 {strides = array<i32>} : memref<16x128xf32, #tpu.memory_space<vmem>>, vector<8x128xf32>,
    %9 = math.cos %6 : vector<8x128xf32>
    %c8 = arith.constant 8 : index
    %c0_5 = arith.constant 0 : index
    %10 = vector.load %arg3[%c8, %c0_5] : memref<16x128xf32, #tpu.memory_space<vmem>>, vector<8x128xf32>
    tpu.vector_store %arg3[%c8, %c0_5], %9 {strides = array<i32>} : memref<16x128xf32, #tpu.memory_space<vmem>>, vector<8x128xf32>,
    return
  }
  func.func @transform_0(%arg0: i32) -> (i32, i32) {
    %c0_i32 = arith.constant 0 : i32
    %c0_i32_0 = arith.constant 0 : i32
    return %c0_i32, %arg0 : i32, i32
  }
  func.func @transform_1(%arg0: i32) -> (i32, i32) {
    %c0_i32 = arith.constant 0 : i32
    %c0_i32_0 = arith.constant 0 : i32
    %c0_i32_1 = arith.constant 0 : i32
    return %c0_i32, %c0_i32_0 : i32, i32
  }
  func.func @transform_2(%arg0: i32) -> (i32, i32) {
    %c0_i32 = arith.constant 0 : i32
    %c0_i32_0 = arith.constant 0 : i32
    return %c0_i32, %arg0 : i32, i32
  }
}

</mosaic_0001>

<llo_original>
// kernel: tpu_custom_call.1
$region0: #{tpu_custom_call.1}
  #allocation0 [shape = 'u32[]', space=smem, size = 0x4, offset = 0x4, fixed_abs, tag = 'smem constant byte address 0x4 - core index']
  #allocation1 [shape = 'u32[72,128]{1,0:T(1,128)}', space=vmem, size = 0x9000, scoped, tag = 'internal scratch']
  %s0 = inlined_call_operand.vmem [shape: f32[1,128], index: 0, kind: input, shape index: {}]
  %s1 = inlined_call_operand.vmem [shape: f32[8,1], index: 1, kind: input, shape index: {}]
  %s2 = inlined_call_operand.hbm [shape: f32[16,128], index: 2, kind: output, shape index: {}]
  %s3 = sld [smem:[#allocation0]]
  $region18: #{tpu_custom_call.1} parent=0
    _
  %s5 = ssub.s32 1, %s3
  %s6 = scalar_select 0, %s5, %s3
  $region1: #{tpu_custom_call.1} parent=0
    #allocation2 [shape = 'u8[8192]{0}', space=vmem, size = 0x2000, scoped, tag = 'output window, operand 0, single buffered']
    #allocation3 [shape = 's32[1]{0}', space=sflag, size = 0x4, scoped, tag = 'scoped memory for tpu_custom_call.1']
    %7 = vsyncpa [#allocation3], 0
    // Predicated region
    $region2: #{tpu_custom_call.1} parent=1 // pred_check
      _
    $region3: #{tpu_custom_call.1} parent=1 // pred_check_branch
      %9 = sbr.rel (0) target = $region5
    $region4: #{tpu_custom_call.1} parent=1 // pred_region
      _
    $region5: #{tpu_custom_call.1} parent=1 // pred_fallthru
      _
    // Predicated region
    $region6: #{tpu_custom_call.1} parent=1 // pred_check
      _
    $region7: #{tpu_custom_call.1} parent=1 // pred_check_branch
      %11 = sbr.rel (0) target = $region9
    $region8: #{tpu_custom_call.1} parent=1 // pred_region
      _
    $region9: #{tpu_custom_call.1} parent=1 // pred_fallthru
      _
    %v12 = vld [vmem:[%s1] sm:$0xff]
    %v13 = vmul.f32 %v12, 6.2831855
    %v14 = vld [vmem:[%s0] sm:$0x1]
    %16 = vset.pattern.permute.xlu0 0
    %17 = vperm.xlu0 %16, %v13
    %v18 = vpop.permute.xlu0 %17
    %v21 = vperm.slane %v14, 0
    %v23 = vmul.f32 %v18, %v21
    %v24 = vand.u32 2147483647, %v23
    %vm25 = vcmp.le.f32.partialorder %v24, 0.7853982
    %vm26 = vcmp.lt.s32.totalorder %v23, 0
    %v27 = vand.u32 %v23, 2139095040
    %v28 = vshrl.u32 %v27, 23
    %v29 = vsub.s32 %v28, 127
    %v30 = vand.u32 2147483647, %v23
    %v31 = vand.u32 %v30, 8388607
    %v32 = vor.u32 %v31, 8388608
    %v33 = vsub.s32 0, %v32
    %v34 = vadd.s32 %v29, 1
    %vm35 = vcmp.gt.s32.totalorder %v34, 0
    %v36 = vsel %vm35, %v34, 0
    %v37 = vshrl.u32 %v36, 5
    %v38 = vand.u32 %v36, 31
    %v39 = vsub.s32 32, %v38
    %v40 = vshrl.u32 683565275, %v39
    %v41 = vshll.u32 683565275, %v38
    %v42 = vshrl.u32 2475754826, %v39
    %v43 = vor.u32 %v41, %v42
    %v44 = vshll.u32 2475754826, %v38
    %v45 = vshrl.u32 2131351028, %v39
    %v46 = vor.u32 %v44, %v45
    %v47 = vshll.u32 2131351028, %v38
    %v48 = vshrl.u32 2102212464, %v39
    %v49 = vor.u32 %v47, %v48
    %v50 = vshll.u32 2102212464, %v38
    %v51 = vshrl.u32 920167782, %v39
    %v52 = vor.u32 %v50, %v51
    %v53 = vshll.u32 920167782, %v38
    %v54 = vshrl.u32 1326507024, %v39
    %v55 = vor.u32 %v53, %v54
    %vm56 = vcmp.lt.s32.totalorder %v37, 1
    %vm57 = vcmp.lt.s32.totalorder %v37, 2
    %vm58 = vcmp.lt.s32.totalorder %v37, 3
    %vm59 = vcmp.lt.s32.totalorder %v37, 4
    %v60 = vsel %vm56, %v40, %v43
    %v61 = vsel %vm59, %v49, 2102212464
    %v62 = vsel %vm58, %v46, %v61
    %v63 = vsel %vm57, %v60, %v62
    %v64 = vsel %vm56, %v43, %v46
    %v65 = vsel %vm59, %v52, 920167782
    %v66 = vsel %vm58, %v49, %v65
    %v67 = vsel %vm57, %v64, %v66
    %v68 = vsel %vm56, %v46, %v49
    %v69 = vsel %vm59, %v55, 1326507024
    %v70 = vsel %vm58, %v52, %v69
    %v71 = vsel %vm57, %v68, %v70
    %v72 = vshll.u32 %v32, 8
    %v73 = vand.u32 %v72, 65535
    %v74 = vshrl.u32 %v72, 16
    %v75 = vand.u32 %v71, 65535
    %v76 = vshrl.u32 %v71, 16
    %v77 = vmul.u32 %v73, %v75
    %v78 = vmul.u32 %v73, %v76
    %v79 = vmul.u32 %v74, %v75
    %v80 = vmul.u32 %v74, %v76
    %v81 = vshll.u32 %v78, 16
    %v82 = vshrl.u32 %v78, 16
    %v83 = vshll.u32 %v79, 16
    %v84 = vshrl.u32 %v79, 16
    %vm85 = vc.u32 %v77, %v81
    %v86 = vsel %vm85, 1, 0
    %v87 = vadd.s32 %v77, %v81
    %v88 = vadd.s32 %v80, %v86
    %vm89 = vc.u32 %v87, %v83
    %v90 = vsel %vm89, 1, 0
    %v91 = vadd.s32 %v87, %v83
    %v92 = vadd.s32 %v88, %v90
    %v93 = vadd.s32 %v92, %v82
    %v94 = vadd.s32 %v93, %v84
    %v95 = vand.u32 %v72, 65535
    %v96 = vshrl.u32 %v72, 16
    %v97 = vand.u32 %v67, 65535
    %v98 = vshrl.u32 %v67, 16
    %v99 = vmul.u32 %v95, %v97
    %v100 = vmul.u32 %v95, %v98
    %v101 = vmul.u32 %v96, %v97
    %v102 = vmul.u32 %v96, %v98
    %v103 = vshll.u32 %v100, 16
    %v104 = vshrl.u32 %v100, 16
    %v105 = vshll.u32 %v101, 16
    %v106 = vshrl.u32 %v101, 16
    %vm107 = vc.u32 %v99, %v103
    %v108 = vsel %vm107, 1, 0
    %v109 = vadd.s32 %v99, %v103
    %v110 = vadd.s32 %v102, %v108
    %vm111 = vc.u32 %v109, %v105
    %v112 = vsel %vm111, 1, 0
    %v113 = vadd.s32 %v109, %v105
    %v114 = vadd.s32 %v110, %v112
    %v115 = vadd.s32 %v114, %v104
    %v116 = vadd.s32 %v115, %v106
    %v117 = vmul.u32 %v72, %v63
    %v118 = vadd.s32 %v94, %v113
    %vm119 = vc.u32 %v94, %v113
    %v120 = vadd.s32 %v116, 1
    %v121 = vsel %vm119, %v120, %v116
    %v122 = vadd.s32 %v117, %v121
    %v123 = vadd.s32 %v122, 536870912
    %v124 = vshrl.u32 %v123, 30
    %v125 = vshll.u32 %v124, 30
    %v126 = vsub.s32 %v122, %v125
    %vm127 = vcmp.lt.s32.totalorder %v126, 0
    %v128 = vsub.s32 0, %v126
    %v129 = vsel %vm127, %v128, %v126
    %v130 = vclz %v129
    %v131 = vsub.s32 %v130, 2
    %vm132 = vcmp.gt.s32.totalorder 0, %v131
    %v133 = vsel %vm132, 0, %v131
    %v134 = vsub.s32 32, %v133
    %v135 = vshll.u32 %v126, %v133
    %v136 = vshrl.u32 %v118, %v134
    %v137 = vor.u32 %v135, %v136
    %v138 = vsub.s32 4294967266, %v133
    %v139 = vadd.s32 %v138, 127
    %v140 = vshll.u32 %v139, 23
    %v141 = vor.u32 4788187, %v140
    %v142 = vand.u32 2147483647, %v141
    %v144 = vcvt.s32.f32 %v137
    %v145 = vmul.f32 %v144, %v142
    %v146 = vxor.u32 %v145, 2147483648
    %v147 = vsel %vm26, %v146, %v145
    %v148 = vsub.s32 4, %v124
    %v149 = vsel %vm26, %v148, %v124
    %v150 = vsel %vm25, %v23, %v147
    %v151 = vsel %vm25, 0, %v149
    %v152 = vmul.f32 %v150, %v150
    %v153 = vmul.f32 %v152, -0.001358992
    %v154 = vadd.f32 %v153, 0.041655596
    %v155 = vmul.f32 %v152, %v154
    %v156 = vadd.f32 %v155, -0.4999988
    %v157 = vmul.f32 %v152, %v156
    %v158 = vadd.f32 1.0, %v157
    %v159 = vmul.f32 %v150, %v150
    %v160 = vmul.f32 %v159, -0.00019511016
    %v161 = vadd.f32 %v160, 0.008332121
    %v162 = vmul.f32 %v159, %v161
    %v163 = vadd.f32 %v162, -0.16666654
    %v164 = vmul.f32 %v159, %v163
    %v165 = vadd.f32 %v164, 1.0
    %v166 = vmul.f32 %v165, %v150
    %vm167 = vweird.f32 %v23
    %v168 = vadd.s32 %v151, 3
    %v169 = vand.u32 %v168, 3
    %vm170 = vcmp.lt.s32.totalorder %v169, 2
    %vm171 = vcmp.eq.s32.totalorder %v169, 0
    %v172 = vxor.u32 %v166, 2147483648
    %v173 = vsel %vm171, %v158, %v172
    %vm174 = vcmp.eq.s32.totalorder %v169, 2
    %v175 = vxor.u32 %v158, 2147483648
    %v176 = vsel %vm174, %v175, %v166
    %v177 = vsel %vm170, %v173, %v176
    %v178 = vsel %vm167, nan, %v177
    %179 = vst [vmem:[#allocation2] sm:$0xff] %v178
    %v180 = vand.u32 2147483647, %v23
    %vm181 = vcmp.le.f32.partialorder %v180, 0.7853982
    %vm182 = vcmp.lt.s32.totalorder %v23, 0
    %v183 = vand.u32 %v23, 2139095040
    %v184 = vshrl.u32 %v183, 23
    %v185 = vsub.s32 %v184, 127
    %v186 = vand.u32 2147483647, %v23
    %v187 = vand.u32 %v186, 8388607
    %v188 = vor.u32 %v187, 8388608
    %v189 = vsub.s32 0, %v188
    %v190 = vadd.s32 %v185, 1
    %vm191 = vcmp.gt.s32.totalorder %v190, 0
    %v192 = vsel %vm191, %v190, 0
    %v193 = vshrl.u32 %v192, 5
    %v194 = vand.u32 %v192, 31
    %v195 = vsub.s32 32, %v194
    %v196 = vshrl.u32 683565275, %v195
    %v197 = vshll.u32 683565275, %v194
    %v198 = vshrl.u32 2475754826, %v195
    %v199 = vor.u32 %v197, %v198
    %v200 = vshll.u32 2475754826, %v194
    %v201 = vshrl.u32 2131351028, %v195
    %v202 = vor.u32 %v200, %v201
    %v203 = vshll.u32 2131351028, %v194
    %v204 = vshrl.u32 2102212464, %v195
    %v205 = vor.u32 %v203, %v204
    %v206 = vshll.u32 2102212464, %v194
    %v207 = vshrl.u32 920167782, %v195
    %v208 = vor.u32 %v206, %v207
    %v209 = vshll.u32 920167782, %v194
    %v210 = vshrl.u32 1326507024, %v195
    %v211 = vor.u32 %v209, %v210
    %vm212 = vcmp.lt.s32.totalorder %v193, 1
    %vm213 = vcmp.lt.s32.totalorder %v193, 2
    %vm214 = vcmp.lt.s32.totalorder %v193, 3
    %vm215 = vcmp.lt.s32.totalorder %v193, 4
    %v216 = vsel %vm212, %v196, %v199
    %v217 = vsel %vm215, %v205, 2102212464
    %v218 = vsel %vm214, %v202, %v217
    %v219 = vsel %vm213, %v216, %v218
    %v220 = vsel %vm212, %v199, %v202
    %v221 = vsel %vm215, %v208, 920167782
    %v222 = vsel %vm214, %v205, %v221
    %v223 = vsel %vm213, %v220, %v222
    %v224 = vsel %vm212, %v202, %v205
    %v225 = vsel %vm215, %v211, 1326507024
    %v226 = vsel %vm214, %v208, %v225
    %v227 = vsel %vm213, %v224, %v226
    %v228 = vshll.u32 %v188, 8
    %v229 = vand.u32 %v228, 65535
    %v230 = vshrl.u32 %v228, 16
    %v231 = vand.u32 %v227, 65535
    %v232 = vshrl.u32 %v227, 16
    %v233 = vmul.u32 %v229, %v231
    %v234 = vmul.u32 %v229, %v232
    %v235 = vmul.u32 %v230, %v231
    %v236 = vmul.u32 %v230, %v232
    %v237 = vshll.u32 %v234, 16
    %v238 = vshrl.u32 %v234, 16
    %v239 = vshll.u32 %v235, 16
    %v240 = vshrl.u32 %v235, 16
    %vm241 = vc.u32 %v233, %v237
    %v242 = vsel %vm241, 1, 0
    %v243 = vadd.s32 %v233, %v237
    %v244 = vadd.s32 %v236, %v242
    %vm245 = vc.u32 %v243, %v239
    %v246 = vsel %vm245, 1, 0
    %v247 = vadd.s32 %v243, %v239
    %v248 = vadd.s32 %v244, %v246
    %v249 = vadd.s32 %v248, %v238
    %v250 = vadd.s32 %v249, %v240
    %v251 = vand.u32 %v228, 65535
    %v252 = vshrl.u32 %v228, 16
    %v253 = vand.u32 %v223, 65535
    %v254 = vshrl.u32 %v223, 16
    %v255 = vmul.u32 %v251, %v253
    %v256 = vmul.u32 %v251, %v254
    %v257 = vmul.u32 %v252, %v253
    %v258 = vmul.u32 %v252, %v254
    %v259 = vshll.u32 %v256, 16
    %v260 = vshrl.u32 %v256, 16
    %v261 = vshll.u32 %v257, 16
    %v262 = vshrl.u32 %v257, 16
    %vm263 = vc.u32 %v255, %v259
    %v264 = vsel %vm263, 1, 0
    %v265 = vadd.s32 %v255, %v259
    %v266 = vadd.s32 %v258, %v264
    %vm267 = vc.u32 %v265, %v261
    %v268 = vsel %vm267, 1, 0
    %v269 = vadd.s32 %v265, %v261
    %v270 = vadd.s32 %v266, %v268
    %v271 = vadd.s32 %v270, %v260
    %v272 = vadd.s32 %v271, %v262
    %v273 = vmul.u32 %v228, %v219
    %v274 = vadd.s32 %v250, %v269
    %vm275 = vc.u32 %v250, %v269
    %v276 = vadd.s32 %v272, 1
    %v277 = vsel %vm275, %v276, %v272
    %v278 = vadd.s32 %v273, %v277
    %v279 = vadd.s32 %v278, 536870912
    %v280 = vshrl.u32 %v279, 30
    %v281 = vshll.u32 %v280, 30
    %v282 = vsub.s32 %v278, %v281
    %vm283 = vcmp.lt.s32.totalorder %v282, 0
    %v284 = vsub.s32 0, %v282
    %v285 = vsel %vm283, %v284, %v282
    %v286 = vclz %v285
    %v287 = vsub.s32 %v286, 2
    %vm288 = vcmp.gt.s32.totalorder 0, %v287
    %v289 = vsel %vm288, 0, %v287
    %v290 = vsub.s32 32, %v289
    %v291 = vshll.u32 %v282, %v289
    %v292 = vshrl.u32 %v274, %v290
    %v293 = vor.u32 %v291, %v292
    %v294 = vsub.s32 4294967266, %v289
    %v295 = vadd.s32 %v294, 127
    %v296 = vshll.u32 %v295, 23
    %v297 = vor.u32 4788187, %v296
    %v298 = vand.u32 2147483647, %v297
    %v300 = vcvt.s32.f32 %v293
    %v301 = vmul.f32 %v300, %v298
    %v302 = vxor.u32 %v301, 2147483648
    %v303 = vsel %vm182, %v302, %v301
    %v304 = vsub.s32 4, %v280
    %v305 = vsel %vm182, %v304, %v280
    %v306 = vsel %vm181, %v23, %v303
    %v307 = vsel %vm181, 0, %v305
    %v308 = vmul.f32 %v306, %v306
    %v309 = vmul.f32 %v308, -0.001358992
    %v310 = vadd.f32 %v309, 0.041655596
    %v311 = vmul.f32 %v308, %v310
    %v312 = vadd.f32 %v311, -0.4999988
    %v313 = vmul.f32 %v308, %v312
    %v314 = vadd.f32 1.0, %v313
    %v315 = vmul.f32 %v306, %v306
    %v316 = vmul.f32 %v315, -0.00019511016
    %v317 = vadd.f32 %v316, 0.008332121
    %v318 = vmul.f32 %v315, %v317
    %v319 = vadd.f32 %v318, -0.16666654
    %v320 = vmul.f32 %v315, %v319
    %v321 = vadd.f32 %v320, 1.0
    %v322 = vmul.f32 %v321, %v306
    %vm323 = vweird.f32 %v23
    %v324 = vand.u32 %v307, 3
    %vm325 = vcmp.lt.s32.totalorder %v324, 2
    %vm326 = vcmp.eq.s32.totalorder %v324, 0
    %v327 = vxor.u32 %v322, 2147483648
    %v328 = vsel %vm326, %v314, %v327
    %vm329 = vcmp.eq.s32.totalorder %v324, 2
    %v330 = vxor.u32 %v314, 2147483648
    %v331 = vsel %vm329, %v330, %v322
    %v332 = vsel %vm325, %v328, %v331
    %v333 = vsel %vm323, nan, %v332
    %334 = vst [vmem:[#allocation2 + $0x8] sm:$0xff] %v333
    // Predicated region
    $region10: #{tpu_custom_call.1} parent=1 // pred_check
      _
    $region11: #{tpu_custom_call.1} parent=1 // pred_check_branch
      %336 = sbr.rel (0) target = $region13
    $region12: #{tpu_custom_call.1} parent=1 // pred_region
      %338 = vsyncadd [#allocation3], 0
      %s339 = sshll.u32 [#allocation2], 4
      %s340 = int_to_ptr.vmem [resolvable:$true] %s339
      %s341 = sshll.u32 %s2, 4
      %s342 = int_to_ptr.hbm [resolvable:$true] %s341
      %347 = dma.vmem_to_hbm [thread:$0]  %s340, 256, %s342, [#allocation3], 128, 128, 8
    $region13: #{tpu_custom_call.1} parent=1 // pred_fallthru
      _
    // Predicated region
    $region14: #{tpu_custom_call.1} parent=1 // pred_check
      _
    $region15: #{tpu_custom_call.1} parent=1 // pred_check_branch
      %349 = sbr.rel (0) target = $region17
    $region16: #{tpu_custom_call.1} parent=1 // pred_region
      %351 = dma.done [#allocation3], 256
    $region17: #{tpu_custom_call.1} parent=1 // pred_fallthru
      _
    %352 = vsyncpa [#allocation3], 1

</llo_original>
